<compile_context>
chip_gen: v5e
topology: v5e:2x2
jax: 0.10.0
libtpu: 0.0.40
codegen_flags: <defaults>
</compile_context>

<pallas_src>
import functools

import jax
import jax.numpy as jnp
from jax.experimental import pallas as pl
from jax.experimental.pallas import tpu as pltpu


def _locked_dropout_kernel(x_ref, m_ref, o_ref):
    # x_ref: (block_seq, B*F) tile of the input, native dtype.
    # m_ref: (1, B*F) scaled keep-mask, resident in VMEM (constant index_map).
    # Single broadcast multiply -> the kernel is purely DMA/HBM bound.
    o_ref[...] = x_ref[...] * m_ref[...]


def _pick_block_seq(S, BF, itemsize):
    """Sublane-aligned seq-tile size targeting ~8 MiB blocks, >=4 tiles."""
    sub = {1: 32, 2: 16, 4: 8}.get(itemsize, 8)
    if S <= sub:
        return S
    bytes_per_row = max(1, BF * itemsize)
    target_bytes = 8 * 1024 * 1024
    bs = max(sub, target_bytes // bytes_per_row)
    # Keep at least ~4 tiles so v7x's dual TensorCores both get work and the
    # pipeline has prefetch-ahead.
    bs = min(bs, max(sub, S // 4))
    bs = max(sub, (bs // sub) * sub)
    bs = min(bs, S)
    # Prefer a block_seq that divides S so the last tile is not ragged.
    if S % bs != 0:
        for cand in range(bs, sub - 1, -sub):
            if S % cand == 0:
                bs = cand
                break
    return bs


@functools.partial(jax.jit, static_argnames=("dropout", "training", "block_seq"))
def locked_dropout(x, key, *, dropout=0.5, training=True, block_seq=None):
    """Pallas LockedDropout.  x: (seq, batch, features)."""
    if (not training) or dropout == 0.0:
        return x  # identity, same as the torch module

    S, B, F = x.shape
    BF = B * F
    keep_prob = 1.0 - float(dropout)

    # Precompute the scaled (1, B*F) mask once in the wrapper (perf feedback):
    # bernoulli(1-p) / (1-p), scaled in x's dtype exactly like torch's
    # `.bernoulli_(1 - dropout).div_(1 - dropout)`.
    keep = jax.random.bernoulli(key, p=keep_prob, shape=(1, BF))
    mask = keep.astype(x.dtype) / jnp.asarray(keep_prob, dtype=x.dtype)

    # Flatten to 2-D so the lane dim is B*F (lane-dense loads/stores) and the
    # seq axis sits on sublanes.
    x2 = x.reshape(S, BF)

    if block_seq is None:
        block_seq = _pick_block_seq(S, BF, x.dtype.itemsize)
    block_seq = int(min(block_seq, S))

    grid = (pl.cdiv(S, block_seq),)

    out = pl.pallas_call(
        _locked_dropout_kernel,
        out_shape=jax.ShapeDtypeStruct((S, BF), x.dtype),
        grid=grid,
        in_specs=[
            # Streamed input tile.
            pl.BlockSpec((block_seq, BF), lambda i: (i, 0)),
            # Mask: constant index_map -> fetched once, resident across tiles.
            pl.BlockSpec((1, BF), lambda i: (0, 0)),
        ],
        out_specs=pl.BlockSpec((block_seq, BF), lambda i: (i, 0)),
        compiler_params=pltpu.CompilerParams(
            dimension_semantics=("parallel",),   # seq tiles are independent
            vmem_limit_bytes=48 << 20,           # safe on v5e/v6e/v7x; covers
                                                 # 2x(in+out) 8 MiB buffers
        ),
    )(x2, mask)

    return out.reshape(S, B, F)


if __name__ == "__main__":
    root = jax.random.PRNGKey(0)
    data_key, mask_key = jax.random.split(root)

    # (seq, batch, features) — B*F = 1024 keeps the output lane-dense.
    S, B, F = 16, 8, 128
    dropout_p = 0.5

    x = jax.random.normal(data_key, (S, B, F), dtype=jnp.float32)

    # Training mode: mask sampled once, locked across the seq axis.
    # block_seq=8 -> grid=(2,) to exercise the pipelined / parallel grid.
    y_train = locked_dropout(x, mask_key, dropout=dropout_p, training=True,
                             block_seq=8)
    jax.block_until_ready(y_train)
    assert y_train.shape == x.shape
    assert bool(jnp.all(jnp.isfinite(y_train)))

    keep = (y_train != 0)
    # Locked property: identical mask at every sequence position.
    assert bool(jnp.all(keep == keep[:1]))
    # Kept elements are exactly x / (1 - p).
    scale = 1.0 / (1.0 - dropout_p)
    assert bool(jnp.allclose(jnp.where(keep, y_train, 0.0),
                             jnp.where(keep, x * scale, 0.0),
                             atol=1e-5, rtol=1e-5))
    # Roughly the right drop fraction.
    frac_kept = float(jnp.mean(keep[0].astype(jnp.float32)))
    assert 0.25 < frac_kept < 0.75, frac_kept

    # Eval mode: identity, exactly like the torch module.
    y_eval = locked_dropout(x, mask_key, dropout=dropout_p, training=False)
    jax.block_until_ready(y_eval)
    assert bool(jnp.allclose(y_eval, x))

    # Also exercise the automatic block_seq heuristic path.
    y_auto = locked_dropout(x, mask_key, dropout=dropout_p, training=True)
    jax.block_until_ready(y_auto)
    assert y_auto.shape == x.shape

    print("KERNEL_OK")
</pallas_src>

<mosaic_0001>
module attributes {stable_mosaic.version = 11 : i64} {
  func.func @_locked_dropout_kernel(%arg0: i32, %arg1: memref<8x1024xf32, #tpu.memory_space<vmem>>, %arg2: memref<1x1024xf32, #tpu.memory_space<vmem>>, %arg3: memref<8x1024xf32, #tpu.memory_space<vmem>>) attributes {dimension_semantics = [#tpu.dimension_semantics<parallel>], iteration_bounds = array<i64: 2>, scalar_prefetch = 0 : i64, scratch_operands = 0 : i64, tpu.core_type = #tpu.core_type<tc>, window_params = [{transform_indices = @transform_0, window_bounds = array<i64: 8, 1024>}, {pipeline_mode = #tpu.pipeline_mode<synchronous>, transform_indices = @transform_1, window_bounds = array<i64: 1, 1024>}, {transform_indices = @transform_2, window_bounds = array<i64: 8, 1024>}]} {
    %c0 = arith.constant 0 : index
    %c0_0 = arith.constant 0 : index
    %0 = vector.load %arg1[%c0, %c0_0] : memref<8x1024xf32, #tpu.memory_space<vmem>>, vector<8x1024xf32>
    %c0_1 = arith.constant 0 : index
    %c0_2 = arith.constant 0 : index
    %1 = vector.load %arg2[%c0_1, %c0_2] : memref<1x1024xf32, #tpu.memory_space<vmem>>, vector<1x1024xf32>
    %2 = vector.broadcast %1 : vector<1x1024xf32> to vector<8x1024xf32>
    %3 = arith.mulf %0, %2 : vector<8x1024xf32>
    %c0_3 = arith.constant 0 : index
    %c0_4 = arith.constant 0 : index
    %4 = vector.load %arg3[%c0_3, %c0_4] : memref<8x1024xf32, #tpu.memory_space<vmem>>, vector<8x1024xf32>
    tpu.vector_store %arg3[%c0_3, %c0_4], %3 {strides = array<i32>} : memref<8x1024xf32, #tpu.memory_space<vmem>>, vector<8x1024xf32>,
    return
  }
  func.func @transform_0(%arg0: i32) -> (i32, i32) {
    %c0_i32 = arith.constant 0 : i32
    %c0_i32_0 = arith.constant 0 : i32
    return %arg0, %c0_i32 : i32, i32
  }
  func.func @transform_1(%arg0: i32) -> (i32, i32) {
    %c0_i32 = arith.constant 0 : i32
    %c0_i32_0 = arith.constant 0 : i32
    %c0_i32_1 = arith.constant 0 : i32
    return %c0_i32, %c0_i32_0 : i32, i32
  }
  func.func @transform_2(%arg0: i32) -> (i32, i32) {
    %c0_i32 = arith.constant 0 : i32
    %c0_i32_0 = arith.constant 0 : i32
    return %arg0, %c0_i32 : i32, i32
  }
}

</mosaic_0001>

<llo_original>
// kernel: locked_dropout.1
$region0: #{locked_dropout.1}
  #allocation0 [shape = 'u32[]', space=smem, size = 0x4, offset = 0x4, fixed_abs, tag = 'smem constant byte address 0x4 - core index']
  #allocation1 [shape = 'u32[72,128]{1,0:T(1,128)}', space=vmem, size = 0x9000, scoped, tag = 'internal scratch']
  %s0 = inlined_call_operand.vmem [shape: f32[16,1024], index: 0, kind: input, shape index: {}]
  %s1 = inlined_call_operand.vmem [shape: f32[1,1024], index: 1, kind: input, shape index: {}]
  %s2 = inlined_call_operand.vmem [shape: f32[16,1024], index: 2, kind: output, shape index: {}]
  %s3 = sld [smem:[#allocation0]]
  $region41: #{locked_dropout.1} parent=0
    _
  %s5 = ssub.s32 1, %s3
  %s6 = scalar_select 0, %s5, %s3
  loop: start=0, step=1, limit=4
  $region2: #{locked_dropout.1} parent=0 // loop_pre_header
    _
  $region3: #{locked_dropout.1} parent=0 // loop_header
    %s8 = sphi 0, %s12
    %p9 = scmp.ge.s32.totalorder %s8, 4
    %s18 = sphi 0, %s20
    %s21 = sphi 0, %s18
    %s22 = sphi 0, %s21
    %s38 = sphi 0, %s22
    %s42 = sphi 0, %s42
    %s44 = sphi 0, %s42
    %s45 = sphi 0, %s44
    %s59 = sphi 0, %s45
    %s65 = sphi 0, %s67
    %s68 = sphi 0, %s65
    %s69 = sphi 0, %s68
    %s85 = sphi 0, %s69
  $region4: #{locked_dropout.1} parent=0 // loop_header_branch
    %11 = sbr.rel (%p9) target = $region8
  $region5: #{locked_dropout.1} parent=0 // loop_body
    %s13 = ssub.s32 %s8, 1
    %s14 = ssub.s32 %s8, 2
    %s15 = sadd.s32 %s8, 1
    %s16 = ssub.s32 %s8, %s15
    %p17 = scmp.eq.s32.totalorder %s16, 0
    %s19 = sadd.s32 %s18, 1
    %s20 = scalar_select %p17, %s18, %s19
    %p23 = pneg %p17
    %p24 = scmp.eq.s32.totalorder %s8, 1
    %p25 = por %p23, %p24
    %p26 = scmp.ne.s32.totalorder %s18, %s21
    %p27 = scmp.eq.s32.totalorder %s8, 0
    %p28 = por %p26, %p27
    %p29 = scmp.ne.s32.totalorder %s18, %s21
    %p30 = scmp.eq.s32.totalorder %s13, 1
    %p31 = por %p29, %p30
    %p32 = scmp.ne.s32.totalorder %s21, %s22
    %p33 = scmp.eq.s32.totalorder %s13, 0
    %p34 = por %p32, %p33
    %p35 = scmp.ne.s32.totalorder %s21, %s22
    %p36 = scmp.eq.s32.totalorder %s14, 1
    %p37 = por %p35, %p36
    %p39 = scmp.ne.s32.totalorder %s22, %s38
    %p40 = scmp.eq.s32.totalorder %s14, 0
    %p41 = por %p39, %p40
    %s43 = sadd.s32 %s42, 1
    %p46 = scmp.eq.s32.totalorder %s8, 1
    %p47 = scmp.ne.s32.totalorder %s42, %s44
    %p48 = scmp.eq.s32.totalorder %s8, 0
    %p49 = por %p47, %p48
    %p50 = scmp.ne.s32.totalorder %s42, %s44
    %p51 = scmp.eq.s32.totalorder %s13, 1
    %p52 = por %p50, %p51
    %p53 = scmp.ne.s32.totalorder %s44, %s45
    %p54 = scmp.eq.s32.totalorder %s13, 0
    %p55 = por %p53, %p54
    %p56 = scmp.ne.s32.totalorder %s44, %s45
    %p57 = scmp.eq.s32.totalorder %s14, 1
    %p58 = por %p56, %p57
    %p60 = scmp.ne.s32.totalorder %s45, %s59
    %p61 = scmp.eq.s32.totalorder %s14, 0
    %p62 = por %p60, %p61
    %s63 = ssub.s32 %s8, %s15
    %p64 = scmp.eq.s32.totalorder %s63, 0
    %s66 = sadd.s32 %s65, 1
    %s67 = scalar_select %p64, %s65, %s66
    %p70 = pneg %p64
    %p71 = scmp.eq.s32.totalorder %s8, 1
    %p72 = por %p70, %p71
    %p73 = scmp.ne.s32.totalorder %s65, %s68
    %p74 = scmp.eq.s32.totalorder %s8, 0
    %p75 = por %p73, %p74
    %p76 = scmp.ne.s32.totalorder %s65, %s68
    %p77 = scmp.eq.s32.totalorder %s13, 1
    %p78 = por %p76, %p77
    %p79 = scmp.ne.s32.totalorder %s68, %s69
    %p80 = scmp.eq.s32.totalorder %s13, 0
    %p81 = por %p79, %p80
    %p82 = scmp.ne.s32.totalorder %s68, %s69
    %p83 = scmp.eq.s32.totalorder %s14, 1
    %p84 = por %p82, %p83
    %p86 = scmp.ne.s32.totalorder %s69, %s85
    %p87 = scmp.eq.s32.totalorder %s14, 0
    %p88 = por %p86, %p87
    %p89 = scmp.le.s32.totalorder 1, %s8
    %p90 = scmp.lt.s32.totalorder %s8, 3
    %p91 = pnand %p89, %p90
    %p92 = pneg %p91
    // Predicated region
    $region9: #{locked_dropout.1} parent=5 // pred_check
      _
    $region10: #{locked_dropout.1} parent=5 // pred_check_branch
      %94 = sbr.rel (%p91) target = $region12
    $region11: #{locked_dropout.1} parent=5 // pred_region
      %s95 = ssub.s32 %s8, 1
      // Predicated region
      $region13: #{locked_dropout.1} parent=11 // pred_check
        %p96 = pneg %p55
      $region14: #{locked_dropout.1} parent=11 // pred_check_branch
        %98 = sbr.rel (%p96) target = $region16
      $region15: #{locked_dropout.1} parent=11 // pred_region
        _
      $region16: #{locked_dropout.1} parent=11 // pred_fallthru
        _
    $region12: #{locked_dropout.1} parent=5 // pred_fallthru
      _
    %p99 = scmp.lt.s32.totalorder %s8, 2
    // Predicated region
    $region17: #{locked_dropout.1} parent=5 // pred_check
      %p100 = pneg %p99
    $region18: #{locked_dropout.1} parent=5 // pred_check_branch
      %102 = sbr.rel (%p100) target = $region20
    $region19: #{locked_dropout.1} parent=5 // pred_region
      // Predicated region
      $region21: #{locked_dropout.1} parent=19 // pred_check
        %p103 = pneg %p28
      $region22: #{locked_dropout.1} parent=19 // pred_check_branch
        %105 = sbr.rel (%p103) target = $region24
      $region23: #{locked_dropout.1} parent=19 // pred_region
        %p106 = scmp.lt.s32.totalorder %s8, 1
        %s107 = scalar_select %p106, %s8, 1
        %s108 = smul.addr %s107, 8
        %s109 = smul.addr %s108, 8
        %s110 = scalar_lea.vmem %s0, %s109
      $region24: #{locked_dropout.1} parent=19 // pred_fallthru
        _
    $region20: #{locked_dropout.1} parent=5 // pred_fallthru
      _
    %p111 = scmp.le.s32.totalorder 1, %s8
    %p112 = scmp.lt.s32.totalorder %s8, 3
    %p113 = pnand %p111, %p112
    %p114 = pneg %p113
    // Predicated region
    $region25: #{locked_dropout.1} parent=5 // pred_check
      _
    $region26: #{locked_dropout.1} parent=5 // pred_check_branch
      %116 = sbr.rel (%p113) target = $region28
    $region27: #{locked_dropout.1} parent=5 // pred_region
      %s117 = ssub.s32 %s8, 1
      %p118 = scmp.lt.s32.totalorder %s13, 1
      %s119 = scalar_select %p118, %s13, 1
      %s120 = smul.addr %s119, 8
      %s121 = smul.addr %s120, 8
      %s122 = scalar_lea.vmem %s0, %s121
      %p123 = pneg %p34
      %p124 = pneg %p31
      %p125 = pneg %p55
      %p126 = pneg %p52
      %p127 = pneg %p81
      %p128 = pneg %p78
      %p129 = scmp.lt.s32.totalorder %s13, 1
      %s130 = scalar_select %p129, %s13, 1
      %s131 = smul.addr %s130, 8
      %s132 = smul.addr %s131, 8
      %s133 = scalar_lea.vmem %s2, %s132
      %p134 = scmp.lt.s32.totalorder %s13, 1
      %s135 = scalar_select %p134, %s13, 1
      %s136 = smul.addr %s135, 8
      %s137 = smul.addr %s136, 8
      %s138 = scalar_lea.vmem %s0, %s137
      %p139 = scmp.lt.s32.totalorder %s13, 1
      %s140 = scalar_select %p139, %s13, 1
      %s141 = smul.addr %s140, 8
      %s142 = smul.addr %s141, 8
      %s143 = scalar_lea.vmem %s2, %s142
      %v144 = vld [vmem:[%s138] sm:$0xff]
      %v145 = vld [vmem:[%s138 + $0x8] sm:$0xff]
      %v146 = vld [vmem:[%s138 + $0x10] sm:$0xff]
      %v147 = vld [vmem:[%s138 + $0x18] sm:$0xff]
      %v148 = vld [vmem:[%s138 + $0x20] sm:$0xff]
      %v149 = vld [vmem:[%s138 + $0x28] sm:$0xff]
      %v150 = vld [vmem:[%s138 + $0x30] sm:$0xff]
      %v151 = vld [vmem:[%s138 + $0x38] sm:$0xff]
      %v152 = vld [vmem:[%s1] sm:$0xff]
      %v154 = vperm.slane %v152, 0
      %v155 = vperm.slane %v152, 1
      %v156 = vperm.slane %v152, 2
      %v157 = vperm.slane %v152, 3
      %v158 = vperm.slane %v152, 4
      %v159 = vperm.slane %v152, 5
      %v160 = vperm.slane %v152, 6
      %v161 = vperm.slane %v152, 7
      %v170 = vmul.f32 %v144, %v154
      %v171 = vmul.f32 %v145, %v155
      %v172 = vmul.f32 %v146, %v156
      %v173 = vmul.f32 %v147, %v157
      %v174 = vmul.f32 %v148, %v158
      %v175 = vmul.f32 %v149, %v159
      %v176 = vmul.f32 %v150, %v160
      %v177 = vmul.f32 %v151, %v161
      %178 = vst [vmem:[%s143] sm:$0xff] %v170
      %179 = vst [vmem:[%s143 + $0x8] sm:$0xff] %v171
      %180 = vst [vmem:[%s143 + $0x10] sm:$0xff] %v172
      %181 = vst [vmem:[%s143 + $0x18] sm:$0xff] %v173
      %182 = vst [vmem:[%s143 + $0x20] sm:$0xff] %v174
      %183 = vst [vmem:[%s143 + $0x28] sm:$0xff] %v175
      %184 = vst [vmem:[%s143 + $0x30] sm:$0xff] %v176
      %185 = vst [vmem:[%s143 + $0x38] sm:$0xff] %v177
      %p186 = scmp.lt.s32.totalorder %s13, 1
      %s187 = scalar_select %p186, %s13, 1
      %s188 = smul.addr %s187, 8
      %s189 = smul.addr %s188, 8
      %s190 = scalar_lea.vmem %s2, %s189
      // Predicated region
      $region29: #{locked_dropout.1} parent=27 // pred_check
        %p191 = pneg %p78
      $region30: #{locked_dropout.1} parent=27 // pred_check_branch
        %193 = sbr.rel (%p191) target = $region32
      $region31: #{locked_dropout.1} parent=27 // pred_region
        _
      $region32: #{locked_dropout.1} parent=27 // pred_fallthru
        _
    $region28: #{locked_dropout.1} parent=5 // pred_fallthru
      _
    %p194 = scmp.le.s32.totalorder 2, %s8
    // Predicated region
    $region33: #{locked_dropout.1} parent=5 // pred_check
      %p195 = pneg %p194
    $region34: #{locked_dropout.1} parent=5 // pred_check_branch
      %197 = sbr.rel (%p195) target = $region36
    $region35: #{locked_dropout.1} parent=5 // pred_region
      %s198 = ssub.s32 %s8, 2
      // Predicated region
      $region37: #{locked_dropout.1} parent=35 // pred_check
        %p199 = pneg %p84
      $region38: #{locked_dropout.1} parent=35 // pred_check_branch
        %201 = sbr.rel (%p199) target = $region40
      $region39: #{locked_dropout.1} parent=35 // pred_region
        %p202 = scmp.lt.s32.totalorder %s14, 1
        %s203 = scalar_select %p202, %s14, 1
        %s204 = smul.addr %s203, 8
        %s205 = smul.addr %s204, 8
        %s206 = scalar_lea.vmem %s2, %s205
      $region40: #{locked_dropout.1} parent=35 // pred_fallthru
        _
    $region36: #{locked_dropout.1} parent=5 // pred_fallthru
      _
  $region6: #{locked_dropout.1} parent=0 // loop_footer
    %s12 = sadd.s32 1, %s8
  $region7: #{locked_dropout.1} parent=0 // loop_footer_branch
    %7 = sbr.rel target = $region3
  $region8: #{locked_dropout.1} parent=0 // loop_exit
    _

</llo_original>
